<compile_context>
chip_gen: v7x
topology: tpu7x:2x2x1
jax: 0.10.0
libtpu: 0.0.40
codegen_flags: <defaults>
</compile_context>

<pallas_src>
import jax
import jax.numpy as jnp
from jax.experimental import pallas as pl
from jax.experimental.pallas import tpu as pltpu

# ---- static module hyper-parameters (ResidualBlock(d_att=32, size=3, rate=1)) ----
D_ATT = 32            # d_att
D_HID = D_ATT // 2    # d_att // 2
SIZE = 3              # a_conv kernel_size  (kernel below is specialised to 3)
RATE = 1              # dilation            (kernel below is specialised to 1)
PAD = (SIZE - 1) * RATE // 2
IS_FIRST = False      # -> LayerNorm present
LN_EPS = 1e-5

# ---- packed-parameter layout: one (48, 128) f32 tile holds every weight ----
W_IN_C0 = 0                       # w_in  (D_HID, D_ATT)    rows 0:16, cols  0:32
W_A_C0 = W_IN_C0 + D_ATT          # w_a   (3*D_HID, D_HID)  rows 0:48, cols 32:48 (taps stacked on rows)
W_OUT_C0 = W_A_C0 + D_HID         # w_out (D_ATT, D_HID)    rows 0:32, cols 48:64
B_IN_C = W_OUT_C0 + D_HID
GAMMA_C = B_IN_C + 1
BETA_C = GAMMA_C + 1
B_A_C = BETA_C + 1
B_OUT_C = B_A_C + 1
P_ROWS = SIZE * D_HID             # 48
P_COLS = 128
assert B_OUT_C < P_COLS


def residual_block_kernel(x_ref, e_ref, p_ref, o_ref):
    """One (batch, L-tile) grid step; channels-first blocks (C, TL), L on lanes."""
    tl = x_ref.shape[2]
    j = pl.program_id(1)

    x = x_ref[0]                                    # (D_ATT, TL) f32
    xb = x.astype(jnp.bfloat16)

    # --- packed parameters (single resident VMEM tile; static slices) ---
    w_in = p_ref[0:D_HID, W_IN_C0:W_IN_C0 + D_ATT].astype(jnp.bfloat16)            # (16, 32)
    w_a = p_ref[0:SIZE * D_HID, W_A_C0:W_A_C0 + D_HID].astype(jnp.bfloat16)        # (48, 16)
    w_out = p_ref[0:D_ATT, W_OUT_C0:W_OUT_C0 + D_HID].astype(jnp.bfloat16)         # (32, 16)
    b_in = p_ref[0:D_HID, B_IN_C:B_IN_C + 1]                                       # (16, 1) f32
    gamma = p_ref[0:D_HID, GAMMA_C:GAMMA_C + 1]
    beta = p_ref[0:D_HID, BETA_C:BETA_C + 1]
    b_a = p_ref[0:D_HID, B_A_C:B_A_C + 1]
    b_out = p_ref[0:D_ATT, B_OUT_C:B_OUT_C + 1]                                    # (32, 1)

    # --- 1x1 conv_in + ReLU + LayerNorm over channels (bf16 MXU, f32 math) ---
    h = jnp.dot(w_in, xb, preferred_element_type=jnp.float32) + b_in               # (16, TL)
    h = jnp.maximum(h, 0.0)
    if not IS_FIRST:
        mu = jnp.mean(h, axis=0, keepdims=True)                   # one-pass LN stats
        var = jnp.mean(h * h, axis=0, keepdims=True) - mu * mu
        h = (h - mu) * jax.lax.rsqrt(var + LN_EPS)
        h = h * gamma + beta

    # --- dilated conv (size=3, rate=1): one K=16 matmul with the 3 taps stacked
    #     on the output axis, then +/-1 lane shifts of the outputs (XLU rolls)
    #     and a 2-column patch from the precomputed neighbour-tile edge taps. ---
    g = jnp.dot(w_a, h.astype(jnp.bfloat16), preferred_element_type=jnp.float32)   # (48, TL)
    g0, g1, g2 = g[0:D_HID], g[D_HID:2 * D_HID], g[2 * D_HID:3 * D_HID]

    edges = e_ref[0]                                # (2, D_HID, NTP) f32, per-batch resident
    ntp = edges.shape[2]
    pick = jax.lax.broadcasted_iota(jnp.int32, (D_HID, ntp), 1) == j
    e_l = jnp.sum(jnp.where(pick, edges[0], 0.0), axis=1, keepdims=True)            # (16, 1)
    e_r = jnp.sum(jnp.where(pick, edges[1], 0.0), axis=1, keepdims=True)            # (16, 1)

    lane = jax.lax.broadcasted_iota(jnp.int32, (D_HID, tl), 1)
    a = (g1 + b_a
         + jnp.where(lane == 0, e_l, pltpu.roll(g0, shift=1, axis=1))
         + jnp.where(lane == tl - 1, e_r, pltpu.roll(g2, shift=tl - 1, axis=1)))
    a = jnp.maximum(a, 0.0)                                                          # (16, TL)

    # --- 1x1 conv_out + residual (f32) ---
    y = jnp.dot(w_out, a.astype(jnp.bfloat16), preferred_element_type=jnp.float32)
    o_ref[0] = (y + b_out + x).astype(o_ref.dtype)


def _pick_tile_l(L, cap=4096):
    """Largest lane-aligned tile <= cap dividing L, preferring >= 2 L-tiles."""
    cands = [t for t in range(cap, 127, -128) if L % t == 0]
    if not cands:
        if L <= cap:
            return L                    # small irregular L: one full-width tile
        raise ValueError(f"L={L}: pad the sequence to a multiple of 128 (L > {cap}).")
    for t in cands:
        if L // t >= 2:                 # keep B*nt >= 2 grid steps (v7x 2-TC occupancy)
            return t
    return cands[-1]


def pack_params(params):
    w_in, b_in, gamma, beta, w_a, b_a, w_out, b_out = params
    w_a_stacked = jnp.concatenate([w_a[k] for k in range(SIZE)], axis=0)    # (48, 16)
    p = jnp.zeros((P_ROWS, P_COLS), jnp.float32)
    p = p.at[0:D_HID, W_IN_C0:W_IN_C0 + D_ATT].set(w_in)
    p = p.at[0:SIZE * D_HID, W_A_C0:W_A_C0 + D_HID].set(w_a_stacked)
    p = p.at[0:D_ATT, W_OUT_C0:W_OUT_C0 + D_HID].set(w_out)
    p = p.at[0:D_HID, B_IN_C].set(b_in)
    p = p.at[0:D_HID, GAMMA_C].set(gamma)
    p = p.at[0:D_HID, BETA_C].set(beta)
    p = p.at[0:D_HID, B_A_C].set(b_a)
    p = p.at[0:D_ATT, B_OUT_C].set(b_out)
    return p


def _edge_taps(x_ncl, params, tl, nt, ntp):
    """Per-tile neighbour contributions to the dilated conv, built from just the
    nt-1 tile-boundary columns of x (no full-array pad / copy):

      e[b, 0, :, j] = w_a[0] @ conv_in_ln(x[b, :, j*tl - 1])    (zero for j == 0)
      e[b, 1, :, j] = w_a[2] @ conv_in_ln(x[b, :, (j+1)*tl])    (zero for j == nt-1)

    The zeros at the sequence ends are exactly a_conv's 'same' zero padding of h,
    so no LN is ever evaluated on padded columns.
    """
    w_in, b_in, gamma, beta, w_a, _, _, _ = params
    B = x_ncl.shape[0]
    e = jnp.zeros((B, 2, D_HID, ntp), jnp.float32)
    if nt == 1:
        return e

    def conv_in_ln(cols):                    # (B, C, K) -> (B, D_HID, K), f32
        h = jnp.einsum("oc,bck->bok", w_in, cols) + b_in[None, :, None]
        h = jnp.maximum(h, 0.0)
        if not IS_FIRST:
            mu = jnp.mean(h, axis=1, keepdims=True)
            var = jnp.mean((h - mu) ** 2, axis=1, keepdims=True)
            h = (h - mu) * jax.lax.rsqrt(var + LN_EPS)
            h = h * gamma[None, :, None] + beta[None, :, None]
        return h

    lcols = x_ncl[:, :, tl - 1::tl][:, :, :nt - 1]   # left neighbour cols of tiles 1..nt-1
    rcols = x_ncl[:, :, tl::tl]                      # right neighbour cols of tiles 0..nt-2
    el = jnp.einsum("oi,bik->bok", w_a[0], conv_in_ln(lcols))
    er = jnp.einsum("oi,bik->bok", w_a[2], conv_in_ln(rcols))
    e = e.at[:, 0, :, 1:nt].set(el)
    e = e.at[:, 1, :, 0:nt - 1].set(er)
    return e


def residual_block_pallas(x_ncl, params, *, tile_l=None):
    """x_ncl: (B, d_att, L) float32, PyTorch Conv1d layout. Returns same layout."""
    B, C, L = x_ncl.shape
    assert C == D_ATT
    assert SIZE == 3 and RATE == 1, "kernel is specialised to size=3, rate=1"
    tl = _pick_tile_l(L) if tile_l is None else tile_l
    assert tl == L or (L % tl == 0 and tl % 128 == 0), (L, tl)
    nt = L // tl
    ntp = max(128, ((nt + 127) // 128) * 128)

    edges = _edge_taps(x_ncl, params, tl, nt, ntp)    # (B, 2, D_HID, NTP) lane-dense
    packed = pack_params(params)                      # (48, 128)

    return pl.pallas_call(
        residual_block_kernel,
        out_shape=jax.ShapeDtypeStruct((B, C, L), jnp.float32),
        grid_spec=pltpu.PrefetchScalarGridSpec(
            num_scalar_prefetch=0,
            grid=(B, nt),
            in_specs=[
                pl.BlockSpec((1, C, tl), lambda b, j: (b, 0, j)),               # x tile
                pl.BlockSpec((1, 2, D_HID, ntp), lambda b, j: (b, 0, 0, 0)),     # edge taps (per-batch resident)
                pl.BlockSpec((P_ROWS, P_COLS), lambda b, j: (0, 0)),             # packed params (resident)
            ],
            out_specs=pl.BlockSpec((1, C, tl), lambda b, j: (b, 0, j)),
        ),
        compiler_params=pltpu.CompilerParams(
            dimension_semantics=("parallel", "parallel"),
            vmem_limit_bytes=32 * 1024 * 1024),
    )(x_ncl, edges, packed)


# ---------------- pure-JAX reference (for correctness check) ----------------
def residual_block_ref(x_ncl, params):
    w_in, b_in, gamma, beta, w_a, b_a, w_out, b_out = params
    h = jnp.einsum("oc,bcl->bol", w_in, x_ncl) + b_in[None, :, None]
    h = jnp.maximum(h, 0.0)
    if not IS_FIRST:
        mu = jnp.mean(h, axis=1, keepdims=True)
        var = jnp.mean((h - mu) ** 2, axis=1, keepdims=True)
        h = (h - mu) / jnp.sqrt(var + LN_EPS)
        h = h * gamma[None, :, None] + beta[None, :, None]
    L = x_ncl.shape[2]
    hpad = jnp.pad(h, ((0, 0), (0, 0), (PAD, PAD)))
    a = jnp.zeros_like(h)
    for k in range(SIZE):
        a = a + jnp.einsum("oi,bil->bol", w_a[k], hpad[:, :, k * RATE:k * RATE + L])
    a = jnp.maximum(a + b_a[None, :, None], 0.0)
    return jnp.einsum("oi,bil->bol", w_out, a) + b_out[None, :, None] + x_ncl


def make_params(key):
    ks = jax.random.split(key, 8)
    s = 0.1
    # PyTorch conv1d weights stored as (out, in) matrices; a_conv as (tap, out, in).
    w_in = s * jax.random.normal(ks[0], (D_HID, D_ATT), jnp.float32)
    b_in = s * jax.random.normal(ks[1], (D_HID,), jnp.float32)
    gamma = 1.0 + s * jax.random.normal(ks[2], (D_HID,), jnp.float32)
    beta = s * jax.random.normal(ks[3], (D_HID,), jnp.float32)
    w_a = s * jax.random.normal(ks[4], (SIZE, D_HID, D_HID), jnp.float32)
    b_a = s * jax.random.normal(ks[5], (D_HID,), jnp.float32)
    w_out = s * jax.random.normal(ks[6], (D_ATT, D_HID), jnp.float32)
    b_out = s * jax.random.normal(ks[7], (D_ATT,), jnp.float32)
    return (w_in, b_in, gamma, beta, w_a, b_a, w_out, b_out)


if __name__ == "__main__":
    key = jax.random.PRNGKey(0)
    kx, kp = jax.random.split(key)
    B, L = 2, 1024
    x = jax.random.normal(kx, (B, D_ATT, L), jnp.float32)   # PyTorch NCL layout
    params = make_params(kp)

    # tile_l=256 -> grid (2, 4): exercises interior tile halos and both sequence ends.
    out = residual_block_pallas(x, params, tile_l=256)
    out = jax.block_until_ready(out)

    ref = residual_block_ref(x, params)
    assert out.shape == (B, D_ATT, L)
    # bf16 MXU operands (f32 accumulation) -> tolerance relaxed vs the f32 reference.
    assert jnp.allclose(out, ref, atol=5e-2, rtol=5e-2), "mismatch vs reference"

    print("KERNEL_OK")
</pallas_src>

<mosaic_0001>
module attributes {stable_mosaic.version = 11 : i64} {
  func.func @residual_block_kernel(%arg0: i32, %arg1: i32, %arg2: memref<1x32x256xf32, #tpu.memory_space<vmem>>, %arg3: memref<1x2x16x128xf32, #tpu.memory_space<vmem>>, %arg4: memref<48x128xf32, #tpu.memory_space<vmem>>, %arg5: memref<1x32x256xf32, #tpu.memory_space<vmem>>) attributes {dimension_semantics = [#tpu.dimension_semantics<parallel>, #tpu.dimension_semantics<parallel>], iteration_bounds = array<i64: 2, 4>, scalar_prefetch = 0 : i64, scratch_operands = 0 : i64, tpu.core_type = #tpu.core_type<tc>, window_params = [{transform_indices = @transform_0, window_bounds = array<i64: 1, 32, 256>}, {transform_indices = @transform_1, window_bounds = array<i64: 1, 2, 16, 128>}, {pipeline_mode = #tpu.pipeline_mode<synchronous>, transform_indices = @transform_2, window_bounds = array<i64: 48, 128>}, {transform_indices = @transform_3, window_bounds = array<i64: 1, 32, 256>}]} {
    %c0 = arith.constant 0 : index
    %c0_0 = arith.constant 0 : index
    %c0_1 = arith.constant 0 : index
    %0 = vector.load %arg2[%c0, %c0_0, %c0_1] : memref<1x32x256xf32, #tpu.memory_space<vmem>>, vector<1x32x256xf32>
    %1 = vector.shape_cast %0 : vector<1x32x256xf32> to vector<32x256xf32>
    %2 = arith.truncf %1 : vector<32x256xf32> to vector<32x256xbf16>
    %c0_2 = arith.constant 0 : index
    %c0_3 = arith.constant 0 : index
    %3 = vector.load %arg4[%c0_2, %c0_3] : memref<48x128xf32, #tpu.memory_space<vmem>>, vector<16x32xf32>
    %4 = arith.truncf %3 : vector<16x32xf32> to vector<16x32xbf16>
    %c0_4 = arith.constant 0 : index
    %c32 = arith.constant 32 : index
    %5 = vector.load %arg4[%c0_4, %c32] : memref<48x128xf32, #tpu.memory_space<vmem>>, vector<48x16xf32>
    %6 = arith.truncf %5 : vector<48x16xf32> to vector<48x16xbf16>
    %c0_5 = arith.constant 0 : index
    %c48 = arith.constant 48 : index
    %7 = vector.load %arg4[%c0_5, %c48] : memref<48x128xf32, #tpu.memory_space<vmem>>, vector<32x16xf32>
    %8 = arith.truncf %7 : vector<32x16xf32> to vector<32x16xbf16>
    %c0_6 = arith.constant 0 : index
    %c64 = arith.constant 64 : index
    %9 = vector.load %arg4[%c0_6, %c64] : memref<48x128xf32, #tpu.memory_space<vmem>>, vector<16x1xf32>
    %c0_7 = arith.constant 0 : index
    %c65 = arith.constant 65 : index
    %10 = vector.load %arg4[%c0_7, %c65] : memref<48x128xf32, #tpu.memory_space<vmem>>, vector<16x1xf32>
    %c0_8 = arith.constant 0 : index
    %c66 = arith.constant 66 : index
    %11 = vector.load %arg4[%c0_8, %c66] : memref<48x128xf32, #tpu.memory_space<vmem>>, vector<16x1xf32>
    %c0_9 = arith.constant 0 : index
    %c67 = arith.constant 67 : index
    %12 = vector.load %arg4[%c0_9, %c67] : memref<48x128xf32, #tpu.memory_space<vmem>>, vector<16x1xf32>
    %c0_10 = arith.constant 0 : index
    %c68 = arith.constant 68 : index
    %13 = vector.load %arg4[%c0_10, %c68] : memref<48x128xf32, #tpu.memory_space<vmem>>, vector<32x1xf32>
    %cst = arith.constant dense<0.000000e+00> : vector<16x256xf32>
    %14 = tpu.matmul %4, %2, %cst {dimension_numbers = #tpu.dot_dimension_numbers<[1], [0], [0], [1], [0, 0, 1, 1], [], []>} : vector<16x32xbf16>, vector<32x256xbf16>, vector<16x256xf32> -> vector<16x256xf32>
    %15 = vector.broadcast %9 : vector<16x1xf32> to vector<16x256xf32>
    %16 = arith.addf %14, %15 : vector<16x256xf32>
    %cst_11 = arith.constant 0.000000e+00 : f32
    %17 = vector.broadcast %cst_11 : f32 to vector<16x256xf32>
    %18 = arith.maximumf %16, %17 : vector<16x256xf32>
    %cst_12 = arith.constant dense<0.000000e+00> : vector<256xf32>
    %19 = vector.multi_reduction <add>, %18, %cst_12 [0] : vector<16x256xf32> to vector<256xf32>
    %20 = vector.shape_cast %19 : vector<256xf32> to vector<1x256xf32>
    %cst_13 = arith.constant 1.600000e+01 : f32
    %21 = vector.broadcast %cst_13 : f32 to vector<1x256xf32>
    %22 = arith.divf %20, %21 : vector<1x256xf32>
    %23 = arith.mulf %18, %18 : vector<16x256xf32>
    %cst_14 = arith.constant dense<0.000000e+00> : vector<256xf32>
    %24 = vector.multi_reduction <add>, %23, %cst_14 [0] : vector<16x256xf32> to vector<256xf32>
    %25 = vector.shape_cast %24 : vector<256xf32> to vector<1x256xf32>
    %cst_15 = arith.constant 1.600000e+01 : f32
    %26 = vector.broadcast %cst_15 : f32 to vector<1x256xf32>
    %27 = arith.divf %25, %26 : vector<1x256xf32>
    %28 = arith.mulf %22, %22 : vector<1x256xf32>
    %29 = arith.subf %27, %28 : vector<1x256xf32>
    %30 = vector.broadcast %22 : vector<1x256xf32> to vector<16x256xf32>
    %31 = arith.subf %18, %30 : vector<16x256xf32>
    %cst_16 = arith.constant 9.99999974E-6 : f32
    %32 = vector.broadcast %cst_16 : f32 to vector<1x256xf32>
    %33 = arith.addf %29, %32 : vector<1x256xf32>
    %34 = math.rsqrt %33 : vector<1x256xf32>
    %35 = vector.broadcast %34 : vector<1x256xf32> to vector<16x256xf32>
    %36 = arith.mulf %31, %35 : vector<16x256xf32>
    %37 = vector.broadcast %10 : vector<16x1xf32> to vector<16x256xf32>
    %38 = arith.mulf %36, %37 : vector<16x256xf32>
    %39 = vector.broadcast %11 : vector<16x1xf32> to vector<16x256xf32>
    %40 = arith.addf %38, %39 : vector<16x256xf32>
    %41 = arith.truncf %40 : vector<16x256xf32> to vector<16x256xbf16>
    %cst_17 = arith.constant dense<0.000000e+00> : vector<48x256xf32>
    %42 = tpu.matmul %6, %41, %cst_17 {dimension_numbers = #tpu.dot_dimension_numbers<[1], [0], [0], [1], [0, 0, 1, 1], [], []>} : vector<48x16xbf16>, vector<16x256xbf16>, vector<48x256xf32> -> vector<48x256xf32>
    %43 = vector.extract_strided_slice %42 {offsets = [0, 0], sizes = [16, 256], strides = [1, 1]} : vector<48x256xf32> to vector<16x256xf32>
    %44 = vector.extract_strided_slice %42 {offsets = [16, 0], sizes = [16, 256], strides = [1, 1]} : vector<48x256xf32> to vector<16x256xf32>
    %45 = vector.extract_strided_slice %42 {offsets = [32, 0], sizes = [16, 256], strides = [1, 1]} : vector<48x256xf32> to vector<16x256xf32>
    %c0_18 = arith.constant 0 : index
    %c0_19 = arith.constant 0 : index
    %c0_20 = arith.constant 0 : index
    %c0_21 = arith.constant 0 : index
    %46 = vector.load %arg3[%c0_18, %c0_19, %c0_20, %c0_21] : memref<1x2x16x128xf32, #tpu.memory_space<vmem>>, vector<1x2x16x128xf32>
    %47 = vector.shape_cast %46 : vector<1x2x16x128xf32> to vector<2x16x128xf32>
    %48 = tpu.iota {dimensions = array<i32: 1>} : vector<16x128xi32>
    %49 = vector.broadcast %arg1 : i32 to vector<16x128xi32>
    %50 = arith.cmpi eq, %48, %49 : vector<16x128xi32>
    %51 = vector.extract_strided_slice %47 {offsets = [0, 0, 0], sizes = [1, 16, 128], strides = [1, 1, 1]} : vector<2x16x128xf32> to vector<1x16x128xf32>
    %52 = vector.shape_cast %51 : vector<1x16x128xf32> to vector<16x128xf32>
    %cst_22 = arith.constant 0.000000e+00 : f32
    %53 = vector.broadcast %cst_22 : f32 to vector<16x128xf32>
    %54 = arith.select %50, %52, %53 : vector<16x128xi1>, vector<16x128xf32>
    %cst_23 = arith.constant dense<0.000000e+00> : vector<16xf32>
    %55 = vector.multi_reduction <add>, %54, %cst_23 [1] : vector<16x128xf32> to vector<16xf32>
    %56 = vector.shape_cast %55 : vector<16xf32> to vector<16x1xf32>
    %57 = vector.extract_strided_slice %47 {offsets = [1, 0, 0], sizes = [1, 16, 128], strides = [1, 1, 1]} : vector<2x16x128xf32> to vector<1x16x128xf32>
    %58 = vector.shape_cast %57 : vector<1x16x128xf32> to vector<16x128xf32>
    %cst_24 = arith.constant 0.000000e+00 : f32
    %59 = vector.broadcast %cst_24 : f32 to vector<16x128xf32>
    %60 = arith.select %50, %58, %59 : vector<16x128xi1>, vector<16x128xf32>
    %cst_25 = arith.constant dense<0.000000e+00> : vector<16xf32>
    %61 = vector.multi_reduction <add>, %60, %cst_25 [1] : vector<16x128xf32> to vector<16xf32>
    %62 = vector.shape_cast %61 : vector<16xf32> to vector<16x1xf32>
    %63 = tpu.iota {dimensions = array<i32: 1>} : vector<16x256xi32>
    %64 = vector.broadcast %12 : vector<16x1xf32> to vector<16x256xf32>
    %65 = arith.addf %44, %64 : vector<16x256xf32>
    %c0_i32 = arith.constant 0 : i32
    %66 = vector.broadcast %c0_i32 : i32 to vector<16x256xi32>
    %67 = arith.cmpi eq, %63, %66 : vector<16x256xi32>
    %c1_i32 = arith.constant 1 : i32
    %68 = tpu.dynamic_rotate %43 by %c1_i32 dim 1 : vector<16x256xf32>, i32 -> vector<16x256xf32>
    %69 = vector.shape_cast %56 : vector<16x1xf32> to vector<16x1xf32>
    %70 = vector.broadcast %69 : vector<16x1xf32> to vector<16x256xf32>
    %71 = arith.select %67, %70, %68 : vector<16x256xi1>, vector<16x256xf32>
    %72 = arith.addf %65, %71 : vector<16x256xf32>
    %c255_i32 = arith.constant 255 : i32
    %73 = vector.broadcast %c255_i32 : i32 to vector<16x256xi32>
    %74 = arith.cmpi eq, %63, %73 : vector<16x256xi32>
    %c255_i32_26 = arith.constant 255 : i32
    %75 = tpu.dynamic_rotate %45 by %c255_i32_26 dim 1 : vector<16x256xf32>, i32 -> vector<16x256xf32>
    %76 = vector.shape_cast %62 : vector<16x1xf32> to vector<16x1xf32>
    %77 = vector.broadcast %76 : vector<16x1xf32> to vector<16x256xf32>
    %78 = arith.select %74, %77, %75 : vector<16x256xi1>, vector<16x256xf32>
    %79 = arith.addf %72, %78 : vector<16x256xf32>
    %cst_27 = arith.constant 0.000000e+00 : f32
    %80 = vector.broadcast %cst_27 : f32 to vector<16x256xf32>
    %81 = arith.maximumf %79, %80 : vector<16x256xf32>
    %82 = arith.truncf %81 : vector<16x256xf32> to vector<16x256xbf16>
    %cst_28 = arith.constant dense<0.000000e+00> : vector<32x256xf32>
    %83 = tpu.matmul %8, %82, %cst_28 {dimension_numbers = #tpu.dot_dimension_numbers<[1], [0], [0], [1], [0, 0, 1, 1], [], []>} : vector<32x16xbf16>, vector<16x256xbf16>, vector<32x256xf32> -> vector<32x256xf32>
    %84 = vector.broadcast %13 : vector<32x1xf32> to vector<32x256xf32>
    %85 = arith.addf %83, %84 : vector<32x256xf32>
    %86 = arith.addf %85, %1 : vector<32x256xf32>
    %c0_29 = arith.constant 0 : index
    %c0_30 = arith.constant 0 : index
    %c0_31 = arith.constant 0 : index
    %87 = vector.load %arg5[%c0_29, %c0_30, %c0_31] : memref<1x32x256xf32, #tpu.memory_space<vmem>>, vector<1x32x256xf32>
    %88 = vector.shape_cast %87 : vector<1x32x256xf32> to vector<32x256xf32>
    %89 = vector.shape_cast %86 : vector<32x256xf32> to vector<1x32x256xf32>
    tpu.vector_store %arg5[%c0_29, %c0_30, %c0_31], %89 {strides = array<i32>} : memref<1x32x256xf32, #tpu.memory_space<vmem>>, vector<1x32x256xf32>,
    return
  }
  func.func @transform_0(%arg0: i32, %arg1: i32) -> (i32, i32, i32) {
    %c0_i32 = arith.constant 0 : i32
    %c0_i32_0 = arith.constant 0 : i32
    return %arg0, %c0_i32, %arg1 : i32, i32, i32
  }
  func.func @transform_1(%arg0: i32, %arg1: i32) -> (i32, i32, i32, i32) {
    %c0_i32 = arith.constant 0 : i32
    %c0_i32_0 = arith.constant 0 : i32
    %c0_i32_1 = arith.constant 0 : i32
    %c0_i32_2 = arith.constant 0 : i32
    return %arg0, %c0_i32, %c0_i32_0, %c0_i32_1 : i32, i32, i32, i32
  }
  func.func @transform_2(%arg0: i32, %arg1: i32) -> (i32, i32) {
    %c0_i32 = arith.constant 0 : i32
    %c0_i32_0 = arith.constant 0 : i32
    %c0_i32_1 = arith.constant 0 : i32
    return %c0_i32, %c0_i32_0 : i32, i32
  }
  func.func @transform_3(%arg0: i32, %arg1: i32) -> (i32, i32, i32) {
    %c0_i32 = arith.constant 0 : i32
    %c0_i32_0 = arith.constant 0 : i32
    return %arg0, %c0_i32, %arg1 : i32, i32, i32
  }
}

</mosaic_0001>

<llo_original>
// kernel: tpu_custom_call.1
$region0: #{tpu_custom_call.1}
  #allocation0 [shape = 'u32[]', space=smem, size = 0x4, offset = 0x4, fixed_abs, tag = 'smem constant byte address 0x4 - core index']
  #allocation1 [shape = 'u32[144,128]{1,0:T(1,128)}', space=vmem, size = 0x12000, scoped, tag = 'internal scratch']
  %s0 = inlined_call_operand.hbm [shape: f32[2,32,1024], index: 0, kind: input, shape index: {}]
  %s1 = inlined_call_operand.hbm [shape: f32[2,2,16,128], index: 1, kind: input, shape index: {}]
  %s2 = inlined_call_operand.hbm [shape: f32[48,128], index: 2, kind: input, shape index: {}]
  %s3 = inlined_call_operand.hbm [shape: f32[2,32,1024], index: 3, kind: output, shape index: {}]
  %s4 = sld [smem:[#allocation0]]
  $region57: #{tpu_custom_call.1} parent=0
    _
  %s6 = ssub.s32 1, %s4
  %s7 = scalar_select 0, %s6, %s4
  $region1: #{tpu_custom_call.1} parent=0
    #allocation2 [shape = 'u8[65536]{0}', space=vmem, size = 0x10000, scoped, tag = 'input window, operand 0']
    #allocation3 [shape = 's32[2]{0}', space=sflag, size = 0x8, scoped, tag = 'scoped memory for tpu_custom_call.1']
    #allocation4 [shape = 's32[2]{0}', space=sflag, size = 0x8, scoped, tag = 'scoped memory for tpu_custom_call.1']
    #allocation5 [shape = 'u8[32768]{0}', space=vmem, size = 0x8000, scoped, tag = 'input window, operand 1']
    #allocation6 [shape = 's32[2]{0}', space=sflag, size = 0x8, scoped, tag = 'scoped memory for tpu_custom_call.1']
    #allocation7 [shape = 'u8[24576]{0}', space=vmem, size = 0x6000, scoped, tag = 'input window, operand 2, single buffered']
    #allocation8 [shape = 'u8[65536]{0}', space=vmem, size = 0x10000, scoped, tag = 'output window, operand 0']
    %8 = vsyncpa [#allocation3], 0
    %s9 = scalar_lea.sflag [#allocation3], 1
    %10 = vsyncpa %s9, 0
    %11 = vsyncpa [#allocation6], 0
    %s12 = scalar_lea.sflag [#allocation6], 1
    %13 = vsyncpa %s12, 0
    %14 = vsyncpa [#allocation4], 0
    %s15 = scalar_lea.sflag [#allocation4], 1
    %16 = vsyncpa %s15, 0
    loop: start=0, step=1, limit=10
    $region2: #{tpu_custom_call.1} parent=1 // loop_pre_header
      _
    $region3: #{tpu_custom_call.1} parent=1 // loop_header
      %s18 = sphi 0, %s22
      %p19 = scmp.ge.s32.totalorder %s18, 10
      %s25 = sphi 0, %s37
      %s26 = sphi 0, %s33
      %s27 = sphi 0, %s25
      %s28 = sphi 0, %s26
      %s29 = sphi 0, %s27
      %s30 = sphi 0, %s28
      %s42 = sphi 0, %s44
      %s45 = sphi 0, %s42
      %s46 = sphi 0, %s45
      %s62 = sphi 0, %s46
      %s68 = sphi 0, %s70
      %s71 = sphi 0, %s68
      %s72 = sphi 0, %s71
      %s88 = sphi 0, %s72
      %s92 = sphi 0, %s92
      %s94 = sphi 0, %s92
      %s95 = sphi 0, %s94
      %s109 = sphi 0, %s95
      %s117 = sphi 0, %s119
      %s120 = sphi 0, %s117
      %s121 = sphi 0, %s120
      %s137 = sphi 0, %s121
    $region4: #{tpu_custom_call.1} parent=1 // loop_header_branch
      %21 = sbr.rel (%p19) target = $region8
    $region5: #{tpu_custom_call.1} parent=1 // loop_body
      %s23 = ssub.s32 %s18, 1
      %s24 = ssub.s32 %s18, 2
      %s31 = sadd.s32 1, %s26
      %p32 = scmp.ge.s32.totalorder %s31, 4
      %s33 = scalar_select %p32, 0, %s31
      %s34 = sadd.s32 1, %s25
      %s35 = scalar_select %p32, %s34, %s25
      %p36 = scmp.ge.s32.totalorder %s35, 2
      %s37 = scalar_select %p36, 0, %s35
      %s38 = ssub.s32 %s25, %s37
      %s39 = ssub.s32 %s26, %s33
      %s40 = sor.u32 %s38, %s39
      %p41 = scmp.eq.s32.totalorder %s40, 0
      %s43 = sadd.s32 %s42, 1
      %s44 = scalar_select %p41, %s42, %s43
      %p47 = pneg %p41
      %p48 = scmp.eq.s32.totalorder %s18, 7
      %p49 = por %p47, %p48
      %p50 = scmp.ne.s32.totalorder %s42, %s45
      %p51 = scmp.eq.s32.totalorder %s18, 0
      %p52 = por %p50, %p51
      %p53 = scmp.ne.s32.totalorder %s42, %s45
      %p54 = scmp.eq.s32.totalorder %s23, 7
      %p55 = por %p53, %p54
      %p56 = scmp.ne.s32.totalorder %s45, %s46
      %p57 = scmp.eq.s32.totalorder %s23, 0
      %p58 = por %p56, %p57
      %p59 = scmp.ne.s32.totalorder %s45, %s46
      %p60 = scmp.eq.s32.totalorder %s24, 7
      %p61 = por %p59, %p60
      %p63 = scmp.ne.s32.totalorder %s46, %s62
      %p64 = scmp.eq.s32.totalorder %s24, 0
      %p65 = por %p63, %p64
      %s66 = ssub.s32 %s25, %s37
      %p67 = scmp.eq.s32.totalorder %s66, 0
      %s69 = sadd.s32 %s68, 1
      %s70 = scalar_select %p67, %s68, %s69
      %p73 = pneg %p67
      %p74 = scmp.eq.s32.totalorder %s18, 7
      %p75 = por %p73, %p74
      %p76 = scmp.ne.s32.totalorder %s68, %s71
      %p77 = scmp.eq.s32.totalorder %s18, 0
      %p78 = por %p76, %p77
      %p79 = scmp.ne.s32.totalorder %s68, %s71
      %p80 = scmp.eq.s32.totalorder %s23, 7
      %p81 = por %p79, %p80
      %p82 = scmp.ne.s32.totalorder %s71, %s72
      %p83 = scmp.eq.s32.totalorder %s23, 0
      %p84 = por %p82, %p83
      %p85 = scmp.ne.s32.totalorder %s71, %s72
      %p86 = scmp.eq.s32.totalorder %s24, 7
      %p87 = por %p85, %p86
      %p89 = scmp.ne.s32.totalorder %s72, %s88
      %p90 = scmp.eq.s32.totalorder %s24, 0
      %p91 = por %p89, %p90
      %s93 = sadd.s32 %s92, 1
      %p96 = scmp.eq.s32.totalorder %s18, 7
      %p97 = scmp.ne.s32.totalorder %s92, %s94
      %p98 = scmp.eq.s32.totalorder %s18, 0
      %p99 = por %p97, %p98
      %p100 = scmp.ne.s32.totalorder %s92, %s94
      %p101 = scmp.eq.s32.totalorder %s23, 7
      %p102 = por %p100, %p101
      %p103 = scmp.ne.s32.totalorder %s94, %s95
      %p104 = scmp.eq.s32.totalorder %s23, 0
      %p105 = por %p103, %p104
      %p106 = scmp.ne.s32.totalorder %s94, %s95
      %p107 = scmp.eq.s32.totalorder %s24, 7
      %p108 = por %p106, %p107
      %p110 = scmp.ne.s32.totalorder %s95, %s109
      %p111 = scmp.eq.s32.totalorder %s24, 0
      %p112 = por %p110, %p111
      %s113 = ssub.s32 %s25, %s37
      %s114 = ssub.s32 %s26, %s33
      %s115 = sor.u32 %s113, %s114
      %p116 = scmp.eq.s32.totalorder %s115, 0
      %s118 = sadd.s32 %s117, 1
      %s119 = scalar_select %p116, %s117, %s118
      %p122 = pneg %p116
      %p123 = scmp.eq.s32.totalorder %s18, 7
      %p124 = por %p122, %p123
      %p125 = scmp.ne.s32.totalorder %s117, %s120
      %p126 = scmp.eq.s32.totalorder %s18, 0
      %p127 = por %p125, %p126
      %p128 = scmp.ne.s32.totalorder %s117, %s120
      %p129 = scmp.eq.s32.totalorder %s23, 7
      %p130 = por %p128, %p129
      %p131 = scmp.ne.s32.totalorder %s120, %s121
      %p132 = scmp.eq.s32.totalorder %s23, 0
      %p133 = por %p131, %p132
      %p134 = scmp.ne.s32.totalorder %s120, %s121
      %p135 = scmp.eq.s32.totalorder %s24, 7
      %p136 = por %p134, %p135
      %p138 = scmp.ne.s32.totalorder %s121, %s137
      %p139 = scmp.eq.s32.totalorder %s24, 0
      %p140 = por %p138, %p139
      %p141 = scmp.le.s32.totalorder 1, %s18
      %p142 = scmp.lt.s32.totalorder %s18, 9
      %p143 = pnand %p141, %p142
      %p144 = pneg %p143
      // Predicated region
      $region9: #{tpu_custom_call.1} parent=5 // pred_check
        _
      $region10: #{tpu_custom_call.1} parent=5 // pred_check_branch
        %146 = sbr.rel (%p143) target = $region12
      $region11: #{tpu_custom_call.1} parent=5 // pred_region
        %s147 = ssub.s32 %s18, 1
        // Predicated region
        $region13: #{tpu_custom_call.1} parent=11 // pred_check
          %p148 = pneg %p105
        $region14: #{tpu_custom_call.1} parent=11 // pred_check_branch
          %150 = sbr.rel (%p148) target = $region16
        $region15: #{tpu_custom_call.1} parent=11 // pred_region
          %s152 = ssub.s32 768, 768
          %153 = vsyncadd [#allocation6], %s152
          %s154 = sshll.u32 [#allocation7], 4
          %s155 = int_to_ptr.vmem [resolvable:$true] %s154
          %160 = dma.hbm_to_vmem [thread:$0]  %s2, 768, %s155, [#allocation6], 128, 128, 8
        $region16: #{tpu_custom_call.1} parent=11 // pred_fallthru
          _
      $region12: #{tpu_custom_call.1} parent=5 // pred_fallthru
        _
      %p161 = scmp.lt.s32.totalorder %s18, 8
      // Predicated region
      $region17: #{tpu_custom_call.1} parent=5 // pred_check
        %p162 = pneg %p161
      $region18: #{tpu_custom_call.1} parent=5 // pred_check_branch
        %164 = sbr.rel (%p162) target = $region20
      $region19: #{tpu_custom_call.1} parent=5 // pred_region
        // Predicated region
        $region21: #{tpu_custom_call.1} parent=19 // pred_check
          %p165 = pneg %p52
        $region22: #{tpu_custom_call.1} parent=19 // pred_check_branch
          %167 = sbr.rel (%p165) target = $region24
        $region23: #{tpu_custom_call.1} parent=19 // pred_region
          %s168 = sand.u32 %s42, 1
          %s169 = scalar_lea.sflag [#allocation3], %s168
          %s170 = sand.u32 %s42, 1
          %s171 = smul.addr %s170, 64
          %s172 = scalar_lea.vmem [#allocation2], %s171
          %s173 = smul.u32 2, %s26
          %s175 = ssub.s32 1024, 1024
          %176 = vsyncadd %s169, %s175
          %s177 = smul.addr %s25, 32
          %s178 = sadd.s32 %s173, %s177
          %s179 = smul.addr %s178, 128
          %s180 = scalar_lea.hbm %s0, %s179
          %s181 = sshll.u32 %s172, 4
          %s182 = int_to_ptr.vmem [resolvable:$true] %s181
          %187 = dma.hbm_to_vmem [thread:$0]  %s180, 1024, %s182, %s169, 1024, 256, 16
        $region24: #{tpu_custom_call.1} parent=19 // pred_fallthru
          _
        // Predicated region
        $region25: #{tpu_custom_call.1} parent=19 // pred_check
          %p188 = pneg %p78
        $region26: #{tpu_custom_call.1} parent=19 // pred_check_branch
          %190 = sbr.rel (%p188) target = $region28
        $region27: #{tpu_custom_call.1} parent=19 // pred_region
          %s191 = sand.u32 %s18, 1
          %s192 = scalar_lea.sflag [#allocation6], %s191
          %s193 = sand.u32 %s68, 1
          %s194 = smul.addr %s193, 32
          %s195 = scalar_lea.vmem [#allocation5], %s194
          %s197 = ssub.s32 512, 512
          %198 = vsyncadd %s192, %s197
          %s199 = smul.addr %s25, 4
          %s200 = smul.addr %s199, 128
          %s201 = scalar_lea.hbm %s1, %s200
          %s202 = sshll.u32 %s195, 4
          %s203 = int_to_ptr.vmem [resolvable:$true] %s202
          %208 = dma.hbm_to_vmem [thread:$0]  %s201, 512, %s203, %s192, 128, 128, 8
        $region28: #{tpu_custom_call.1} parent=19 // pred_fallthru
          _
      $region20: #{tpu_custom_call.1} parent=5 // pred_fallthru
        _
      %p209 = scmp.le.s32.totalorder 1, %s18
      %p210 = scmp.lt.s32.totalorder %s18, 9
      %p211 = pnand %p209, %p210
      %p212 = pneg %p211
      // Predicated region
      $region29: #{tpu_custom_call.1} parent=5 // pred_check
        _
      $region30: #{tpu_custom_call.1} parent=5 // pred_check_branch
        %214 = sbr.rel (%p211) target = $region32
      $region31: #{tpu_custom_call.1} parent=5 // pred_region
        %s215 = ssub.s32 %s18, 1
        %s216 = sand.u32 %s45, 1
        %s217 = scalar_lea.sflag [#allocation3], %s216
        %s218 = sand.u32 %s45, 1
        %s219 = smul.addr %s218, 64
        %s220 = scalar_lea.vmem [#allocation2], %s219
        // Predicated region
        $region33: #{tpu_custom_call.1} parent=31 // pred_check
          %p221 = pneg %p58
        $region34: #{tpu_custom_call.1} parent=31 // pred_check_branch
          %223 = sbr.rel (%p221) target = $region36
        $region35: #{tpu_custom_call.1} parent=31 // pred_region
          %224 = dma.done %s217, 1024
        $region36: #{tpu_custom_call.1} parent=31 // pred_fallthru
          _
        %s225 = sand.u32 %s23, 1
        %s226 = scalar_lea.sflag [#allocation6], %s225
        %s227 = sand.u32 %s71, 1
        %s228 = smul.addr %s227, 32
        %s229 = scalar_lea.vmem [#allocation5], %s228
        // Predicated region
        $region37: #{tpu_custom_call.1} parent=31 // pred_check
          %p230 = pneg %p84
        $region38: #{tpu_custom_call.1} parent=31 // pred_check_branch
          %232 = sbr.rel (%p230) target = $region40
        $region39: #{tpu_custom_call.1} parent=31 // pred_region
          %233 = dma.done %s226, 512
        $region40: #{tpu_custom_call.1} parent=31 // pred_fallthru
          _
        // Predicated region
        $region41: #{tpu_custom_call.1} parent=31 // pred_check
          %p234 = pneg %p105
        $region42: #{tpu_custom_call.1} parent=31 // pred_check_branch
          %236 = sbr.rel (%p234) target = $region44
        $region43: #{tpu_custom_call.1} parent=31 // pred_region
          %237 = dma.done [#allocation6], 768
        $region44: #{tpu_custom_call.1} parent=31 // pred_fallthru
          _
        %s238 = sand.u32 %s45, 1
        %s239 = scalar_lea.sflag [#allocation3], %s238
        %s240 = sand.u32 %s45, 1
        %s241 = smul.addr %s240, 64
        %s242 = scalar_lea.vmem [#allocation2], %s241
        %p243 = pneg %p58
        %p244 = pneg %p55
        %s245 = sand.u32 %s23, 1
        %s246 = scalar_lea.sflag [#allocation6], %s245
        %s247 = sand.u32 %s71, 1
        %s248 = smul.addr %s247, 32
        %s249 = scalar_lea.vmem [#allocation5], %s248
        %p250 = pneg %p84
        %p251 = pneg %p81
        %p252 = pneg %p105
        %p253 = pneg %p102
        %p254 = pneg %p133
        %p255 = pneg %p130
        %s256 = sand.u32 %s120, 1
        %s257 = scalar_lea.sflag [#allocation4], %s256
        %s258 = sand.u32 %s120, 1
        %s259 = smul.addr %s258, 64
        %s260 = scalar_lea.vmem [#allocation8], %s259
        %s261 = smul.u32 2, %s28
        %s262 = smul.u32 2, %s28
        %v264 = vld [vmem:[%s220] sm:$0xff]
        %v265 = vld [vmem:[%s220 + $0x8] sm:$0xff]
        %v266 = vld [vmem:[%s220 + $0x10] sm:$0xff]
        %v267 = vld [vmem:[%s220 + $0x18] sm:$0xff]
        %v268 = vld [vmem:[%s220 + $0x20] sm:$0xff]
        %v269 = vld [vmem:[%s220 + $0x28] sm:$0xff]
        %v270 = vld [vmem:[%s220 + $0x30] sm:$0xff]
        %v271 = vld [vmem:[%s220 + $0x38] sm:$0xff]
        %v272 = vpack.c.bf16 %v266, %v264
        %v273 = vpack.c.bf16 %v267, %v265
        %v274 = vpack.c.bf16 %v270, %v268
        %v275 = vpack.c.bf16 %v271, %v269
        %v276 = vld [vmem:[#allocation7] sm:$0xff]
        %v277 = vld [vmem:[#allocation7 + $0x8] sm:$0xff]
        %v278 = vpack.c.bf16 %v277, %v276
        %v279 = vld [vmem:[#allocation7] sm:$0xff]
        %v280 = vld [vmem:[#allocation7 + $0x8] sm:$0xff]
        %v281 = vld [vmem:[#allocation7 + $0x10] sm:$0xff]
        %v282 = vld [vmem:[#allocation7 + $0x18] sm:$0xff]
        %v283 = vld [vmem:[#allocation7 + $0x20] sm:$0xff]
        %v284 = vld [vmem:[#allocation7 + $0x28] sm:$0xff]
        %v285 = vpack.c.bf16 %v280, %v279
        %v286 = vpack.c.bf16 %v282, %v281
        %v287 = vpack.c.bf16 %v284, %v283
        %v288 = vld [vmem:[#allocation7 + $0x10] sm:$0xff]
        %v289 = vld [vmem:[#allocation7 + $0x18] sm:$0xff]
        %v290 = vpack.c.bf16 %v289, %v288
        %292 = vset.pattern.permute.xlu0 64
        %293 = vperm.xlu0 %292, %v276
        %v294 = vpop.permute.xlu0 %293
        %297 = vset.pattern.permute.xlu0 64
        %298 = vperm.xlu0 %297, %v277
        %v299 = vpop.permute.xlu0 %298
        %vm301 = vcmask 261120
        %v303 = vsel %vm301, %v278, 0
        %305 = vmatprep.subr.bf16.mxu0 %v273
        %306 = vmatpush1.bf16.msra.mxu0 %v272
        %307 = vmatprep.subr.bf16.mxu0 %v275
        %308 = vmatpush1.bf16.msra.mxu0 %v274
        %309 = vmatprep.subr.bf16.mxu0 0
        %310 = vmatpush1.bf16.msra.mxu0 0
        %311 = vmatprep.subr.bf16.mxu0 0
        %312 = vmatpush1.bf16.msra.mxu0 0
        %313 = vmatprep.subr.bf16.mxu0 0
        %314 = vmatpush1.bf16.msra.mxu0 0
        %315 = vmatprep.subr.bf16.mxu0 0
        %316 = vmatpush1.bf16.msra.mxu0 0
        %317 = vmatprep.subr.bf16.mxu0 0
        %318 = vmatpush1.bf16.msra.mxu0 0
        %319 = vmatprep.subr.bf16.mxu0 0
        %320 = vmatpush1.bf16.msra.mxu0 0
        %321 = vmatprep.subr.bf16.mxu0 0
        %322 = vmatpush1.bf16.msra.mxu0 0
        %323 = vmatprep.subr.bf16.mxu0 0
        %324 = vmatpush1.bf16.msra.mxu0 0
        %325 = vmatprep.subr.bf16.mxu0 0
        %326 = vmatpush1.bf16.msra.mxu0 0
        %327 = vmatprep.subr.bf16.mxu0 0
        %328 = vmatpush1.bf16.msra.mxu0 0
        %329 = vmatprep.subr.bf16.mxu0 0
        %330 = vmatpush1.bf16.msra.mxu0 0
        %331 = vmatprep.subr.bf16.mxu0 0
        %332 = vmatpush1.bf16.msra.mxu0 0
        %333 = vmatprep.subr.bf16.mxu0 0
        %334 = vmatpush1.bf16.msra.mxu0 0
        %335 = vmatprep.subr.bf16.mxu0 0
        %336 = vmatpush1.bf16.msra.mxu0 0
        %337 = vmatprep.mubr.bf16.mxu0 0
        %338 = vmatmul.mubr.bf16.gmra.mrb[0].mxu0 %v303
        %v339 = vpop.f32.mrb[0].mxu0
        %v340 = vadd.f32 %v294, %v339
        %v341 = vpop.f32.mrb[0].mxu0
        %v342 = vadd.f32 %v294, %v341
        %v343 = vpop.f32.mrb[0].mxu0
        %v344 = vadd.f32 %v299, %v343
        %v345 = vpop.f32.mrb[0].mxu0
        %v346 = vadd.f32 %v299, %v345
        %347 = vdwg.mxu0
        %v348 = vmax.f32 %v340, 0.0
        %v349 = vmax.f32 %v342, 0.0
        %v350 = vmax.f32 %v344, 0.0
        %v351 = vmax.f32 %v346, 0.0
        %v352 = vadd.f32 %v348, %v350
        %v353 = vrot.slane %v352, 4
        %v354 = vadd.f32 %v352, %v353
        %v355 = vrot.slane %v354, 2
        %v356 = vadd.f32 %v354, %v355
        %v357 = vrot.slane %v356, 1
        %v358 = vadd.f32 %v356, %v357
        %v359 = vadd.f32 %v349, %v351
        %v360 = vrot.slane %v359, 4
        %v361 = vadd.f32 %v359, %v360
        %v362 = vrot.slane %v361, 2
        %v363 = vadd.f32 %v361, %v362
        %v364 = vrot.slane %v363, 1
        %v365 = vadd.f32 %v363, %v364
        %v366 = vrcp.pop 16.0
        %v367 = vmul.f32 %v358, %v366
        %v368 = vmul.f32 %v365, %v366
        %v369 = vmul.f32 %v348, %v348
        %v370 = vmul.f32 %v349, %v349
        %v371 = vmul.f32 %v350, %v350
        %v372 = vmul.f32 %v351, %v351
        %v373 = vadd.f32 %v369, %v371
        %v374 = vrot.slane %v373, 4
        %v375 = vadd.f32 %v373, %v374
        %v376 = vrot.slane %v375, 2
        %v377 = vadd.f32 %v375, %v376
        %v378 = vrot.slane %v377, 1
        %v379 = vadd.f32 %v377, %v378
        %v380 = vadd.f32 %v370, %v372
        %v381 = vrot.slane %v380, 4
        %v382 = vadd.f32 %v380, %v381
        %v383 = vrot.slane %v382, 2
        %v384 = vadd.f32 %v382, %v383
        %v385 = vrot.slane %v384, 1
        %v386 = vadd.f32 %v384, %v385
        %v387 = vmul.f32 %v379, %v366
        %v388 = vmul.f32 %v386, %v366
        %v389 = vmul.f32 %v367, %v367
        %v390 = vmul.f32 %v368, %v368
        %v391 = vsub.f32 %v387, %v389
        %v392 = vsub.f32 %v388, %v390
        %v393 = vsub.f32 %v348, %v367
        %v394 = vsub.f32 %v349, %v368
        %v395 = vsub.f32 %v350, %v367
        %v396 = vsub.f32 %v351, %v368
        %v397 = vadd.f32 %v391, 1e-05
        %v398 = vadd.f32 %v392, 1e-05
        %v399 = vrsqrt.pop %v397
        %v400 = vrsqrt.pop %v398
        %v401 = vmul.f32 %v393, %v399
        %v402 = vmul.f32 %v394, %v400
        %v403 = vmul.f32 %v395, %v399
        %v404 = vmul.f32 %v396, %v400
        %405 = vset.pattern.permute.xlu0 65
        %406 = vperm.xlu0 %405, %v276
        %v407 = vpop.permute.xlu0 %406
        %409 = vset.pattern.permute.xlu0 65
        %410 = vperm.xlu0 %409, %v277
        %v411 = vpop.permute.xlu0 %410
        %v413 = vmul.f32 %v401, %v407
        %v414 = vmul.f32 %v402, %v407
        %v415 = vmul.f32 %v403, %v411
        %v416 = vmul.f32 %v404, %v411
        %417 = vset.pattern.permute.xlu0 66
        %418 = vperm.xlu0 %417, %v276
        %v419 = vpop.permute.xlu0 %418
        %421 = vset.pattern.permute.xlu0 66
        %422 = vperm.xlu0 %421, %v277
        %v423 = vpop.permute.xlu0 %422
        %v425 = vadd.f32 %v413, %v419
        %v426 = vadd.f32 %v414, %v419
        %v427 = vadd.f32 %v415, %v423
        %v428 = vadd.f32 %v416, %v423
        %v429 = vpack.c.bf16 %v427, %v425
        %v430 = vpack.c.bf16 %v428, %v426
        %434 = vrot.lane.b32.xlu0 %v285, 96
        %v435 = vpop.permute.xlu0 %434
        %436 = vrot.lane.b32.xlu0 %v286, 96
        %v437 = vpop.permute.xlu0 %436
        %438 = vrot.lane.b32.xlu0 %v287, 96
        %v439 = vpop.permute.xlu0 %438
        %vm440 = vcmask 130048
        %v442 = vsel %vm440, %v435, 0
        %v445 = vsel %vm440, %v437, 0
        %v448 = vsel %vm440, %v439, 0
        %450 = vmatprep.subr.bf16.mxu0 %v430
        %451 = vmatpush1.bf16.msra.mxu0 %v429
        %452 = vmatprep.subr.bf16.mxu0 0
        %453 = vmatpush1.bf16.msra.mxu0 0
        %454 = vmatprep.subr.bf16.mxu0 0
        %455 = vmatpush1.bf16.msra.mxu0 0
        %456 = vmatprep.subr.bf16.mxu0 0
        %457 = vmatpush1.bf16.msra.mxu0 0
        %458 = vmatprep.subr.bf16.mxu0 0
        %459 = vmatpush1.bf16.msra.mxu0 0
        %460 = vmatprep.subr.bf16.mxu0 0
        %461 = vmatpush1.bf16.msra.mxu0 0
        %462 = vmatprep.subr.bf16.mxu0 0
        %463 = vmatpush1.bf16.msra.mxu0 0
        %464 = vmatprep.subr.bf16.mxu0 0
        %465 = vmatpush1.bf16.msra.mxu0 0
        %466 = vmatprep.subr.bf16.mxu0 0
        %467 = vmatpush1.bf16.msra.mxu0 0
        %468 = vmatprep.subr.bf16.mxu0 0
        %469 = vmatpush1.bf16.msra.mxu0 0
        %470 = vmatprep.subr.bf16.mxu0 0
        %471 = vmatpush1.bf16.msra.mxu0 0
        %472 = vmatprep.subr.bf16.mxu0 0
        %473 = vmatpush1.bf16.msra.mxu0 0
        %474 = vmatprep.subr.bf16.mxu0 0
        %475 = vmatpush1.bf16.msra.mxu0 0
        %476 = vmatprep.subr.bf16.mxu0 0
        %477 = vmatpush1.bf16.msra.mxu0 0
        %478 = vmatprep.subr.bf16.mxu0 0
        %479 = vmatpush1.bf16.msra.mxu0 0
        %480 = vmatprep.subr.bf16.mxu0 0
        %481 = vmatpush1.bf16.msra.mxu0 0
        %482 = vmatprep.mubr.bf16.mxu0 0
        %483 = vmatmul.mubr.bf16.gmra.mrb[0].mxu0 %v442
        %v484 = vpop.f32.mrb[0].mxu0
        %v485 = vadd.f32 0.0, %v484
        %v486 = vpop.f32.mrb[0].mxu0
        %v487 = vadd.f32 0.0, %v486
        %v488 = vpop.f32.mrb[0].mxu0
        %v489 = vadd.f32 0.0, %v488
        %v490 = vpop.f32.mrb[0].mxu0
        %v491 = vadd.f32 0.0, %v490
        %492 = vmatprep.mubr.bf16.mxu0 0
        %493 = vmatmul.mubr.bf16.gmra.mrb[0].mxu0 %v445
        %v494 = vpop.f32.mrb[0].mxu0
        %v495 = vadd.f32 0.0, %v494
        %v496 = vpop.f32.mrb[0].mxu0
        %v497 = vadd.f32 0.0, %v496
        %v498 = vpop.f32.mrb[0].mxu0
        %v499 = vadd.f32 0.0, %v498
        %v500 = vpop.f32.mrb[0].mxu0
        %v501 = vadd.f32 0.0, %v500
        %502 = vmatprep.mubr.bf16.mxu0 0
        %503 = vmatmul.mubr.bf16.gmra.mrb[0].mxu0 %v448
        %v504 = vpop.f32.mrb[0].mxu0
        %v505 = vadd.f32 0.0, %v504
        %v506 = vpop.f32.mrb[0].mxu0
        %v507 = vadd.f32 0.0, %v506
        %v508 = vpop.f32.mrb[0].mxu0
        %v509 = vadd.f32 0.0, %v508
        %v510 = vpop.f32.mrb[0].mxu0
        %v511 = vadd.f32 0.0, %v510
        %512 = vdwg.mxu0
        %v513 = vld [vmem:[%s229] sm:$0xff]
        %v514 = vld [vmem:[%s229 + $0x8] sm:$0xff]
        %v515 = vld [vmem:[%s229 + $0x10] sm:$0xff]
        %v516 = vld [vmem:[%s229 + $0x18] sm:$0xff]
        %v517 = vlaneseq
        %v518 = vand.u32 %v517, 127
        %v519 = vstv %s28
        %vm520 = vcmp.eq.s32.totalorder %v518, %v519
        %v521 = vsel %vm520, %v513, 0.0
        %v522 = vsel %vm520, %v514, 0.0
        %523 = vadd.xlane.f32.xlu0 %v521
        %v524 = vpop.xlane.xlu0 %523
        %525 = vadd.xlane.f32.xlu0 %v522
        %v526 = vpop.xlane.xlu0 %525
        %v527 = vsel %vm520, %v515, 0.0
        %v528 = vsel %vm520, %v516, 0.0
        %529 = vadd.xlane.f32.xlu0 %v527
        %v530 = vpop.xlane.xlu0 %529
        %531 = vadd.xlane.f32.xlu0 %v528
        %v532 = vpop.xlane.xlu0 %531
        %v533 = vadd.s32 %v518, 128
        %534 = vset.pattern.permute.xlu0 67
        %535 = vperm.xlu0 %534, %v276
        %v536 = vpop.permute.xlu0 %535
        %538 = vset.pattern.permute.xlu0 67
        %539 = vperm.xlu0 %538, %v277
        %v540 = vpop.permute.xlu0 %539
        %v542 = vadd.f32 %v495, %v536
        %v543 = vadd.f32 %v497, %v536
        %v544 = vadd.f32 %v499, %v540
        %v545 = vadd.f32 %v501, %v540
        %vm546 = vcmp.eq.s32.totalorder %v518, 0
        %vm547 = vcmp.eq.s32.totalorder %v533, 0
        %548 = vrot.lane.b32.xlu0 %v485, 1
        %v549 = vpop.permute.xlu0 %548
        %550 = vrot.lane.b32.xlu0 %v489, 1
        %v551 = vpop.permute.xlu0 %550
        %552 = vrot.lane.b32.xlu0 %v487, 1
        %v553 = vpop.permute.xlu0 %552
        %554 = vrot.lane.b32.xlu0 %v491, 1
        %v555 = vpop.permute.xlu0 %554
        %vm556 = vcmp.lt.s32.totalorder %v518, 1
        %v557 = vsel %vm556, %v549, %v553
        %v558 = vsel %vm556, %v551, %v555
        %v559 = vsel %vm556, %v553, %v549
        %v560 = vsel %vm556, %v555, %v551
        %v561 = vsel %vm546, %v524, %v559
        %v562 = vsel %vm547, %v524, %v557
        %v563 = vsel %vm546, %v526, %v560
        %v564 = vsel %vm547, %v526, %v558
        %v565 = vadd.f32 %v542, %v561
        %v566 = vadd.f32 %v543, %v562
        %v567 = vadd.f32 %v544, %v563
        %v568 = vadd.f32 %v545, %v564
        %vm569 = vcmp.eq.s32.totalorder %v518, 255
        %vm570 = vcmp.eq.s32.totalorder %v533, 255
        %571 = vrot.lane.b32.xlu0 %v505, 127
        %v572 = vpop.permute.xlu0 %571
        %573 = vrot.lane.b32.xlu0 %v509, 127
        %v574 = vpop.permute.xlu0 %573
        %575 = vrot.lane.b32.xlu0 %v507, 127
        %v576 = vpop.permute.xlu0 %575
        %577 = vrot.lane.b32.xlu0 %v511, 127
        %v578 = vpop.permute.xlu0 %577
        %vm579 = vcmp.lt.s32.totalorder %v518, 127
        %v580 = vsel %vm579, %v572, %v576
        %v581 = vsel %vm579, %v574, %v578
        %v582 = vsel %vm579, %v576, %v572
        %v583 = vsel %vm579, %v578, %v574
        %v584 = vsel %vm569, %v530, %v580
        %v585 = vsel %vm570, %v530, %v582
        %v586 = vsel %vm569, %v532, %v581
        %v587 = vsel %vm570, %v532, %v583
        %v588 = vadd.f32 %v565, %v584
        %v589 = vadd.f32 %v566, %v585
        %v590 = vadd.f32 %v567, %v586
        %v591 = vadd.f32 %v568, %v587
        %v592 = vmax.f32 %v588, 0.0
        %v593 = vmax.f32 %v589, 0.0
        %v594 = vmax.f32 %v590, 0.0
        %v595 = vmax.f32 %v591, 0.0
        %v596 = vpack.c.bf16 %v594, %v592
        %v597 = vpack.c.bf16 %v595, %v593
        %598 = vset.pattern.permute.xlu0 68
        %599 = vperm.xlu0 %598, %v276
        %v600 = vpop.permute.xlu0 %599
        %602 = vset.pattern.permute.xlu0 68
        %603 = vperm.xlu0 %602, %v277
        %v604 = vpop.permute.xlu0 %603
        %607 = vset.pattern.permute.xlu0 68
        %608 = vperm.xlu0 %607, %v288
        %v609 = vpop.permute.xlu0 %608
        %612 = vset.pattern.permute.xlu0 68
        %613 = vperm.xlu0 %612, %v289
        %v614 = vpop.permute.xlu0 %613
        %618 = vrot.lane.b32.xlu0 %v278, 80
        %v619 = vpop.permute.xlu0 %618
        %620 = vrot.lane.b32.xlu0 %v290, 80
        %v621 = vpop.permute.xlu0 %620
        %v623 = vsel %vm440, %v619, 0
        %v626 = vsel %vm440, %v621, 0
        %628 = vmatprep.subr.bf16.mxu0 %v597
        %629 = vmatpush1.bf16.msra.mxu0 %v596
        %630 = vmatprep.subr.bf16.mxu0 0
        %631 = vmatpush1.bf16.msra.mxu0 0
        %632 = vmatprep.subr.bf16.mxu0 0
        %633 = vmatpush1.bf16.msra.mxu0 0
        %634 = vmatprep.subr.bf16.mxu0 0
        %635 = vmatpush1.bf16.msra.mxu0 0
        %636 = vmatprep.subr.bf16.mxu0 0
        %637 = vmatpush1.bf16.msra.mxu0 0
        %638 = vmatprep.subr.bf16.mxu0 0
        %639 = vmatpush1.bf16.msra.mxu0 0
        %640 = vmatprep.subr.bf16.mxu0 0
        %641 = vmatpush1.bf16.msra.mxu0 0
        %642 = vmatprep.subr.bf16.mxu0 0
        %643 = vmatpush1.bf16.msra.mxu0 0
        %644 = vmatprep.subr.bf16.mxu0 0
        %645 = vmatpush1.bf16.msra.mxu0 0
        %646 = vmatprep.subr.bf16.mxu0 0
        %647 = vmatpush1.bf16.msra.mxu0 0
        %648 = vmatprep.subr.bf16.mxu0 0
        %649 = vmatpush1.bf16.msra.mxu0 0
        %650 = vmatprep.subr.bf16.mxu0 0
        %651 = vmatpush1.bf16.msra.mxu0 0
        %652 = vmatprep.subr.bf16.mxu0 0
        %653 = vmatpush1.bf16.msra.mxu0 0
        %654 = vmatprep.subr.bf16.mxu0 0
        %655 = vmatpush1.bf16.msra.mxu0 0
        %656 = vmatprep.subr.bf16.mxu0 0
        %657 = vmatpush1.bf16.msra.mxu0 0
        %658 = vmatprep.subr.bf16.mxu0 0
        %659 = vmatpush1.bf16.msra.mxu0 0
        %660 = vmatprep.mubr.bf16.mxu0 0
        %661 = vmatmul.mubr.bf16.gmra.mrb[0].mxu0 %v623
        %v662 = vpop.f32.mrb[0].mxu0
        %v663 = vadd.f32 %v600, %v662
        %v664 = vpop.f32.mrb[0].mxu0
        %v665 = vadd.f32 %v600, %v664
        %v666 = vpop.f32.mrb[0].mxu0
        %v667 = vadd.f32 %v604, %v666
        %v668 = vpop.f32.mrb[0].mxu0
        %v669 = vadd.f32 %v604, %v668
        %670 = vmatprep.mubr.bf16.mxu0 0
        %671 = vmatmul.mubr.bf16.gmra.mrb[0].mxu0 %v626
        %v672 = vpop.f32.mrb[0].mxu0
        %v673 = vadd.f32 %v609, %v672
        %v674 = vpop.f32.mrb[0].mxu0
        %v675 = vadd.f32 %v609, %v674
        %v676 = vpop.f32.mrb[0].mxu0
        %v677 = vadd.f32 %v614, %v676
        %v678 = vpop.f32.mrb[0].mxu0
        %v679 = vadd.f32 %v614, %v678
        %680 = vdwg.mxu0
        %v681 = vadd.f32 %v663, %v264
        %v682 = vadd.f32 %v665, %v265
        %v683 = vadd.f32 %v667, %v266
        %v684 = vadd.f32 %v669, %v267
        %v685 = vadd.f32 %v673, %v268
        %v686 = vadd.f32 %v675, %v269
        %v687 = vadd.f32 %v677, %v270
        %v688 = vadd.f32 %v679, %v271
        %689 = vst [vmem:[%s260] sm:$0xff] %v681
        %690 = vst [vmem:[%s260 + $0x8] sm:$0xff] %v682
        %691 = vst [vmem:[%s260 + $0x10] sm:$0xff] %v683
        %692 = vst [vmem:[%s260 + $0x18] sm:$0xff] %v684
        %693 = vst [vmem:[%s260 + $0x20] sm:$0xff] %v685
        %694 = vst [vmem:[%s260 + $0x28] sm:$0xff] %v686
        %695 = vst [vmem:[%s260 + $0x30] sm:$0xff] %v687
        %696 = vst [vmem:[%s260 + $0x38] sm:$0xff] %v688
        %s697 = sand.u32 %s120, 1
        %s698 = scalar_lea.sflag [#allocation4], %s697
        %s699 = sand.u32 %s120, 1
        %s700 = smul.addr %s699, 64
        %s701 = scalar_lea.vmem [#allocation8], %s700
        // Predicated region
        $region45: #{tpu_custom_call.1} parent=31 // pred_check
          %p702 = pneg %p130
        $region46: #{tpu_custom_call.1} parent=31 // pred_check_branch
          %704 = sbr.rel (%p702) target = $region48
        $region47: #{tpu_custom_call.1} parent=31 // pred_region
          %s705 = smul.u32 2, %s28
          %s707 = ssub.s32 1024, 1024
          %708 = vsyncadd %s698, %s707
          %s709 = smul.addr %s27, 32
          %s710 = sadd.s32 %s705, %s709
          %s711 = smul.addr %s710, 128
          %s712 = scalar_lea.hbm %s3, %s711
          %s713 = sshll.u32 %s701, 4
          %s714 = int_to_ptr.vmem [resolvable:$true] %s713
          %719 = dma.vmem_to_hbm [thread:$0]  %s714, 1024, %s712, %s698, 256, 1024, 16
        $region48: #{tpu_custom_call.1} parent=31 // pred_fallthru
          _
      $region32: #{tpu_custom_call.1} parent=5 // pred_fallthru
        _
      %p720 = scmp.le.s32.totalorder 2, %s18
      // Predicated region
      $region49: #{tpu_custom_call.1} parent=5 // pred_check
        %p721 = pneg %p720
      $region50: #{tpu_custom_call.1} parent=5 // pred_check_branch
        %723 = sbr.rel (%p721) target = $region52
      $region51: #{tpu_custom_call.1} parent=5 // pred_region
        %s724 = ssub.s32 %s18, 2
        // Predicated region
        $region53: #{tpu_custom_call.1} parent=51 // pred_check
          %p725 = pneg %p136
        $region54: #{tpu_custom_call.1} parent=51 // pred_check_branch
          %727 = sbr.rel (%p725) target = $region56
        $region55: #{tpu_custom_call.1} parent=51 // pred_region
          %s728 = sand.u32 %s121, 1
          %s729 = scalar_lea.sflag [#allocation4], %s728
          %s730 = sand.u32 %s121, 1
          %s731 = smul.addr %s730, 64
          %s732 = scalar_lea.vmem [#allocation8], %s731
          %733 = dma.done %s729, 1024
        $region56: #{tpu_custom_call.1} parent=51 // pred_fallthru
          _
      $region52: #{tpu_custom_call.1} parent=5 // pred_fallthru
        _
    $region6: #{tpu_custom_call.1} parent=1 // loop_footer
      %s22 = sadd.s32 1, %s18
    $region7: #{tpu_custom_call.1} parent=1 // loop_footer_branch
      %17 = sbr.rel target = $region3
    $region8: #{tpu_custom_call.1} parent=1 // loop_exit
      _
    %734 = vsyncpa [#allocation3], 1
    %s735 = scalar_lea.sflag [#allocation3], 1
    %736 = vsyncpa %s735, 1
    %737 = vsyncpa [#allocation6], 1
    %s738 = scalar_lea.sflag [#allocation6], 1
    %739 = vsyncpa %s738, 1
    %740 = vsyncpa [#allocation4], 1
    %s741 = scalar_lea.sflag [#allocation4], 1
    %742 = vsyncpa %s741, 1

</llo_original>
